<compile_context>
chip_gen: v6e
topology: v6e:2x2x1
jax: 0.10.0
libtpu: 0.0.40
codegen_flags: <defaults>
</compile_context>

<pallas_src>
import math
import jax
import jax.numpy as jnp
from jax.experimental import pallas as pl
from jax.experimental.pallas import tpu as pltpu


# ----------------------------------------------------------------------------- utils
def _round_up(x, m):
    return ((x + m - 1) // m) * m


def _gelu_exact(x_f32):
    # Exact (erf) GELU, matches torch.nn.functional.gelu default.
    return 0.5 * x_f32 * (1.0 + jax.lax.erf(x_f32 * jnp.float32(1.0 / math.sqrt(2.0))))


def _pad2(a, rows, cols):
    pr, pc = rows - a.shape[0], cols - a.shape[1]
    if pr == 0 and pc == 0:
        return a
    return jnp.pad(a, ((0, pr), (0, pc)))


def _choose_tiles(K, N, *, tk_max=512, tn_max=512):
    """Pick lane-dense, VMEM-bounded K / N tiles (full dim when small)."""
    if N <= tn_max:
        tn = _round_up(N, 128)           # keep output stores lane-dense (128-aligned)
        n_pad = tn
    else:
        tn = tn_max if N % tn_max == 0 else (256 if N % 256 == 0 else 128)
        n_pad = _round_up(N, tn)
    if K <= 2 * tk_max:
        tk = K                           # full-K block (equals full array dim)
        k_pad = K
    else:
        tk = tk_max if K % tk_max == 0 else (256 if K % 256 == 0 else 128)
        k_pad = _round_up(K, tk)
    return tk, tn, k_pad, n_pad


_HAS_BUFFERED = hasattr(pl, "Buffered")


def _block_spec(shape, index_map, single_buffer):
    # Single-buffer blocks whose index_map is constant over the grid (resident weights).
    if single_buffer and _HAS_BUFFERED:
        try:
            return pl.BlockSpec(shape, index_map, pipeline_mode=pl.Buffered(1))
        except TypeError:
            pass
    return pl.BlockSpec(shape, index_map)


# ----------------------------------------------------------------------------- kernels
def _geglu_kernel(x_ref, wh_ref, wg_ref, bh_ref, bg_ref, o_ref, acc_h, acc_g):
    # grid = (M/tm, N/tn, K/tk); K is the reduction axis (last, "arbitrary").
    k = pl.program_id(2)

    @pl.when(k == 0)
    def _():
        acc_h[...] = jnp.zeros_like(acc_h)
        acc_g[...] = jnp.zeros_like(acc_g)

    x = x_ref[...]  # native dtype -> native MXU path, f32 accumulation
    acc_h[...] += jnp.dot(x, wh_ref[...], preferred_element_type=jnp.float32)
    acc_g[...] += jnp.dot(x, wg_ref[...], preferred_element_type=jnp.float32)

    @pl.when(k == pl.num_programs(2) - 1)
    def _():
        h = acc_h[...] + bh_ref[...].astype(jnp.float32)
        g = acc_g[...] + bg_ref[...].astype(jnp.float32)
        o_ref[...] = (h * _gelu_exact(g)).astype(o_ref.dtype)


def _linear_kernel(x_ref, w_ref, b_ref, o_ref, acc):
    k = pl.program_id(2)

    @pl.when(k == 0)
    def _():
        acc[...] = jnp.zeros_like(acc)

    acc[...] += jnp.dot(x_ref[...], w_ref[...], preferred_element_type=jnp.float32)

    @pl.when(k == pl.num_programs(2) - 1)
    def _():
        o_ref[...] = (acc[...] + b_ref[...].astype(jnp.float32)).astype(o_ref.dtype)


# ----------------------------------------------------------------------------- pallas_call wrappers
def _geglu_matmul(x2, wh, wg, bh, bg, *, tm):
    """x2: (m_pad, K) with m_pad % tm == 0. Returns (m_pad, N) = h * gelu(gate)."""
    m_pad, K = x2.shape
    N = wh.shape[1]
    tk, tn, k_pad, n_pad = _choose_tiles(K, N)

    x_p = _pad2(x2, m_pad, k_pad)
    wh_p, wg_p = _pad2(wh, k_pad, n_pad), _pad2(wg, k_pad, n_pad)
    bh_p, bg_p = _pad2(bh, 1, n_pad), _pad2(bg, 1, n_pad)

    nm, nn, nk = m_pad // tm, n_pad // tn, k_pad // tk
    w_single = (nn == 1 and nk == 1)     # weight block never changes -> single buffer
    b_single = (nn == 1)

    out = pl.pallas_call(
        _geglu_kernel,
        out_shape=jax.ShapeDtypeStruct((m_pad, n_pad), x2.dtype),
        grid_spec=pltpu.PrefetchScalarGridSpec(
            num_scalar_prefetch=0,
            grid=(nm, nn, nk),
            in_specs=[
                pl.BlockSpec((tm, tk), lambda i, j, k: (i, k)),
                _block_spec((tk, tn), lambda i, j, k: (k, j), w_single),
                _block_spec((tk, tn), lambda i, j, k: (k, j), w_single),
                _block_spec((1, tn), lambda i, j, k: (0, j), b_single),
                _block_spec((1, tn), lambda i, j, k: (0, j), b_single),
            ],
            out_specs=pl.BlockSpec((tm, tn), lambda i, j, k: (i, j)),
            scratch_shapes=[pltpu.VMEM((tm, tn), jnp.float32),
                            pltpu.VMEM((tm, tn), jnp.float32)],
        ),
        compiler_params=pltpu.CompilerParams(
            dimension_semantics=("parallel", "parallel", "arbitrary")),
    )(x_p, wh_p, wg_p, bh_p, bg_p)
    return out[:, :N]


def _linear_matmul(x2, w_t, b, *, tm):
    """x2: (m_pad, K); w_t: (K, N); b: (1, N). Returns (m_pad, N) = x2 @ w_t + b."""
    m_pad, K = x2.shape
    N = w_t.shape[1]
    tk, tn, k_pad, n_pad = _choose_tiles(K, N)

    x_p = _pad2(x2, m_pad, k_pad)
    w_p = _pad2(w_t, k_pad, n_pad)
    b_p = _pad2(b, 1, n_pad)

    nm, nn, nk = m_pad // tm, n_pad // tn, k_pad // tk
    w_single = (nn == 1 and nk == 1)
    b_single = (nn == 1)

    out = pl.pallas_call(
        _linear_kernel,
        out_shape=jax.ShapeDtypeStruct((m_pad, n_pad), x2.dtype),
        grid_spec=pltpu.PrefetchScalarGridSpec(
            num_scalar_prefetch=0,
            grid=(nm, nn, nk),
            in_specs=[
                pl.BlockSpec((tm, tk), lambda i, j, k: (i, k)),
                _block_spec((tk, tn), lambda i, j, k: (k, j), w_single),
                _block_spec((1, tn), lambda i, j, k: (0, j), b_single),
            ],
            out_specs=pl.BlockSpec((tm, tn), lambda i, j, k: (i, j)),
            scratch_shapes=[pltpu.VMEM((tm, tn), jnp.float32)],
        ),
        compiler_params=pltpu.CompilerParams(
            dimension_semantics=("parallel", "parallel", "arbitrary")),
    )(x_p, w_p, b_p)
    return out[:, :N]


# ----------------------------------------------------------------------------- module
def prepare_feed_forward_params(w1, b1, w2, b2):
    """One-time param prep (hoists transpose + GEGLU split off the per-forward hot path)."""
    inner = w1.shape[0] // 2
    return dict(
        w1h=jnp.asarray(w1[:inner].T),                    # (dim_in, inner)  -> "hidden"
        w1g=jnp.asarray(w1[inner:].T),                    # (dim_in, inner)  -> "gate"
        b1h=jnp.asarray(b1[:inner]).reshape(1, inner),
        b1g=jnp.asarray(b1[inner:]).reshape(1, inner),
        w2t=jnp.asarray(w2.T),                            # (inner, dim_out)
        b2=jnp.asarray(b2).reshape(1, -1),                # (1, dim_out)
    )


def feed_forward(x, params, *, tm=256):
    """FeedForward(dim, mult=4, dropout=0.0, activation_fn='geglu') forward pass."""
    *lead, dim_in = x.shape
    dim_out = params["w2t"].shape[1]
    M = 1
    for d in lead:
        M *= d
    x2 = x.reshape(M, dim_in)

    tm_eff = min(tm, _round_up(max(M, 1), 8))
    m_pad = _round_up(M, tm_eff)
    if m_pad != M:
        x2 = jnp.pad(x2, ((0, m_pad - M), (0, 0)))

    z = _geglu_matmul(x2, params["w1h"], params["w1g"],
                      params["b1h"], params["b1g"], tm=tm_eff)     # (m_pad, inner)
    # Dropout(p=0.0) is an identity here.
    out = _linear_matmul(z, params["w2t"], params["b2"], tm=tm_eff)  # (m_pad, dim_out)
    return out[:M].reshape(*lead, dim_out)


# ----------------------------------------------------------------------------- demo / check
if __name__ == "__main__":
    key = jax.random.PRNGKey(0)
    k_x, k1w, k1b, k2w, k2b = jax.random.split(key, 5)

    batch, seq, dim, mult = 2, 8, 32, 4
    inner = dim * mult          # 128
    dim_out = dim               # 32

    # nn.Linear-style init: U(-1/sqrt(fan_in), 1/sqrt(fan_in))
    bnd1 = 1.0 / math.sqrt(dim)
    w1 = jax.random.uniform(k1w, (2 * inner, dim), jnp.float32, -bnd1, bnd1)
    b1 = jax.random.uniform(k1b, (2 * inner,), jnp.float32, -bnd1, bnd1)
    bnd2 = 1.0 / math.sqrt(inner)
    w2 = jax.random.uniform(k2w, (dim_out, inner), jnp.float32, -bnd2, bnd2)
    b2 = jax.random.uniform(k2b, (dim_out,), jnp.float32, -bnd2, bnd2)

    x = jax.random.normal(k_x, (batch, seq, dim), jnp.float32)

    params = prepare_feed_forward_params(w1, b1, w2, b2)
    out = jax.jit(feed_forward)(x, params)
    jax.block_until_ready(out)

    # Pure-JAX reference (GEGLU -> Dropout(0.0) -> Linear)
    y = x @ w1.T + b1
    h, g = y[..., :inner], y[..., inner:]
    z_ref = h * (0.5 * g * (1.0 + jax.lax.erf(g / jnp.sqrt(2.0))))
    ref = z_ref @ w2.T + b2

    assert out.shape == (batch, seq, dim_out)
    assert jnp.allclose(out, ref, atol=1e-3, rtol=1e-3), float(jnp.max(jnp.abs(out - ref)))

    print("KERNEL_OK")
</pallas_src>

<mosaic_0001>
module attributes {stable_mosaic.version = 11 : i64} {
  func.func @_geglu_kernel(%arg0: i32, %arg1: i32, %arg2: i32, %arg3: memref<16x32xf32, #tpu.memory_space<vmem>>, %arg4: memref<32x128xf32, #tpu.memory_space<vmem>>, %arg5: memref<32x128xf32, #tpu.memory_space<vmem>>, %arg6: memref<1x128xf32, #tpu.memory_space<vmem>>, %arg7: memref<1x128xf32, #tpu.memory_space<vmem>>, %arg8: memref<16x128xf32, #tpu.memory_space<vmem>>, %arg9: memref<16x128xf32, #tpu.memory_space<vmem>>, %arg10: memref<16x128xf32, #tpu.memory_space<vmem>>) attributes {dimension_semantics = [#tpu.dimension_semantics<parallel>, #tpu.dimension_semantics<parallel>, #tpu.dimension_semantics<arbitrary>], iteration_bounds = array<i64: 1, 1, 1>, scalar_prefetch = 0 : i64, scratch_operands = 2 : i64, tpu.core_type = #tpu.core_type<tc>, window_params = [{transform_indices = @transform_0, window_bounds = array<i64: 16, 32>}, {pipeline_mode = #tpu.pipeline_mode<synchronous>, transform_indices = @transform_1, window_bounds = array<i64: 32, 128>}, {pipeline_mode = #tpu.pipeline_mode<synchronous>, transform_indices = @transform_2, window_bounds = array<i64: 32, 128>}, {pipeline_mode = #tpu.pipeline_mode<synchronous>, transform_indices = @transform_3, window_bounds = array<i64: 1, 128>}, {pipeline_mode = #tpu.pipeline_mode<synchronous>, transform_indices = @transform_4, window_bounds = array<i64: 1, 128>}, {transform_indices = @transform_5, window_bounds = array<i64: 16, 128>}]} {
    %c0_i32 = arith.constant 0 : i32
    %0 = arith.cmpi eq, %arg2, %c0_i32 : i32
    %1 = arith.extui %0 : i1 to i32
    %c0_i32_0 = arith.constant 0 : i32
    %2 = arith.cmpi ne, %1, %c0_i32_0 : i32
    scf.if %2 {
      %cst_17 = arith.constant 0.000000e+00 : f32
      %17 = vector.broadcast %cst_17 : f32 to vector<16x128xf32>
      %c0_18 = arith.constant 0 : index
      %c0_19 = arith.constant 0 : index
      %18 = vector.load %arg9[%c0_18, %c0_19] : memref<16x128xf32, #tpu.memory_space<vmem>>, vector<16x128xf32>
      tpu.vector_store %arg9[%c0_18, %c0_19], %17 {strides = array<i32>} : memref<16x128xf32, #tpu.memory_space<vmem>>, vector<16x128xf32>,
      %cst_20 = arith.constant 0.000000e+00 : f32
      %19 = vector.broadcast %cst_20 : f32 to vector<16x128xf32>
      %c0_21 = arith.constant 0 : index
      %c0_22 = arith.constant 0 : index
      %20 = vector.load %arg10[%c0_21, %c0_22] : memref<16x128xf32, #tpu.memory_space<vmem>>, vector<16x128xf32>
      tpu.vector_store %arg10[%c0_21, %c0_22], %19 {strides = array<i32>} : memref<16x128xf32, #tpu.memory_space<vmem>>, vector<16x128xf32>,
    } else {
    }
    %c0 = arith.constant 0 : index
    %c0_1 = arith.constant 0 : index
    %3 = vector.load %arg3[%c0, %c0_1] : memref<16x32xf32, #tpu.memory_space<vmem>>, vector<16x32xf32>
    %c0_2 = arith.constant 0 : index
    %c0_3 = arith.constant 0 : index
    %4 = vector.load %arg9[%c0_2, %c0_3] : memref<16x128xf32, #tpu.memory_space<vmem>>, vector<16x128xf32>
    %c0_4 = arith.constant 0 : index
    %c0_5 = arith.constant 0 : index
    %5 = vector.load %arg4[%c0_4, %c0_5] : memref<32x128xf32, #tpu.memory_space<vmem>>, vector<32x128xf32>
    %cst = arith.constant dense<0.000000e+00> : vector<16x128xf32>
    %6 = tpu.matmul %3, %5, %cst {dimension_numbers = #tpu.dot_dimension_numbers<[1], [0], [0], [1], [0, 0, 1, 1], [], []>} : vector<16x32xf32>, vector<32x128xf32>, vector<16x128xf32> -> vector<16x128xf32>
    %7 = arith.addf %4, %6 : vector<16x128xf32>
    %c0_6 = arith.constant 0 : index
    %c0_7 = arith.constant 0 : index
    %8 = vector.load %arg9[%c0_6, %c0_7] : memref<16x128xf32, #tpu.memory_space<vmem>>, vector<16x128xf32>
    tpu.vector_store %arg9[%c0_6, %c0_7], %7 {strides = array<i32>} : memref<16x128xf32, #tpu.memory_space<vmem>>, vector<16x128xf32>,
    %c0_8 = arith.constant 0 : index
    %c0_9 = arith.constant 0 : index
    %9 = vector.load %arg10[%c0_8, %c0_9] : memref<16x128xf32, #tpu.memory_space<vmem>>, vector<16x128xf32>
    %c0_10 = arith.constant 0 : index
    %c0_11 = arith.constant 0 : index
    %10 = vector.load %arg5[%c0_10, %c0_11] : memref<32x128xf32, #tpu.memory_space<vmem>>, vector<32x128xf32>
    %cst_12 = arith.constant dense<0.000000e+00> : vector<16x128xf32>
    %11 = tpu.matmul %3, %10, %cst_12 {dimension_numbers = #tpu.dot_dimension_numbers<[1], [0], [0], [1], [0, 0, 1, 1], [], []>} : vector<16x32xf32>, vector<32x128xf32>, vector<16x128xf32> -> vector<16x128xf32>
    %12 = arith.addf %9, %11 : vector<16x128xf32>
    %c0_13 = arith.constant 0 : index
    %c0_14 = arith.constant 0 : index
    %13 = vector.load %arg10[%c0_13, %c0_14] : memref<16x128xf32, #tpu.memory_space<vmem>>, vector<16x128xf32>
    tpu.vector_store %arg10[%c0_13, %c0_14], %12 {strides = array<i32>} : memref<16x128xf32, #tpu.memory_space<vmem>>, vector<16x128xf32>,
    %c0_i32_15 = arith.constant 0 : i32
    %14 = arith.cmpi eq, %arg2, %c0_i32_15 : i32
    %15 = arith.extui %14 : i1 to i32
    %c0_i32_16 = arith.constant 0 : i32
    %16 = arith.cmpi ne, %15, %c0_i32_16 : i32
    scf.if %16 {
      %c0_17 = arith.constant 0 : index
      %c0_18 = arith.constant 0 : index
      %17 = vector.load %arg9[%c0_17, %c0_18] : memref<16x128xf32, #tpu.memory_space<vmem>>, vector<16x128xf32>
      %c0_19 = arith.constant 0 : index
      %c0_20 = arith.constant 0 : index
      %18 = vector.load %arg6[%c0_19, %c0_20] : memref<1x128xf32, #tpu.memory_space<vmem>>, vector<1x128xf32>
      %19 = vector.broadcast %18 : vector<1x128xf32> to vector<16x128xf32>
      %20 = arith.addf %17, %19 : vector<16x128xf32>
      %c0_21 = arith.constant 0 : index
      %c0_22 = arith.constant 0 : index
      %21 = vector.load %arg10[%c0_21, %c0_22] : memref<16x128xf32, #tpu.memory_space<vmem>>, vector<16x128xf32>
      %c0_23 = arith.constant 0 : index
      %c0_24 = arith.constant 0 : index
      %22 = vector.load %arg7[%c0_23, %c0_24] : memref<1x128xf32, #tpu.memory_space<vmem>>, vector<1x128xf32>
      %23 = vector.broadcast %22 : vector<1x128xf32> to vector<16x128xf32>
      %24 = arith.addf %21, %23 : vector<16x128xf32>
      %cst_25 = arith.constant 5.000000e-01 : f32
      %25 = vector.broadcast %cst_25 : f32 to vector<16x128xf32>
      %26 = arith.mulf %25, %24 : vector<16x128xf32>
      %cst_26 = arith.constant 0.707106769 : f32
      %27 = vector.broadcast %cst_26 : f32 to vector<16x128xf32>
      %28 = arith.mulf %24, %27 : vector<16x128xf32>
      %29 = math.erf %28 : vector<16x128xf32>
      %cst_27 = arith.constant 1.000000e+00 : f32
      %30 = vector.broadcast %cst_27 : f32 to vector<16x128xf32>
      %31 = arith.addf %30, %29 : vector<16x128xf32>
      %32 = arith.mulf %26, %31 : vector<16x128xf32>
      %33 = arith.mulf %20, %32 : vector<16x128xf32>
      %c0_28 = arith.constant 0 : index
      %c0_29 = arith.constant 0 : index
      %34 = vector.load %arg8[%c0_28, %c0_29] : memref<16x128xf32, #tpu.memory_space<vmem>>, vector<16x128xf32>
      tpu.vector_store %arg8[%c0_28, %c0_29], %33 {strides = array<i32>} : memref<16x128xf32, #tpu.memory_space<vmem>>, vector<16x128xf32>,
    } else {
    }
    return
  }
  func.func @transform_0(%arg0: i32, %arg1: i32, %arg2: i32) -> (i32, i32) {
    %c0_i32 = arith.constant 0 : i32
    return %arg0, %arg2 : i32, i32
  }
  func.func @transform_1(%arg0: i32, %arg1: i32, %arg2: i32) -> (i32, i32) {
    %c0_i32 = arith.constant 0 : i32
    return %arg2, %arg1 : i32, i32
  }
  func.func @transform_2(%arg0: i32, %arg1: i32, %arg2: i32) -> (i32, i32) {
    %c0_i32 = arith.constant 0 : i32
    return %arg2, %arg1 : i32, i32
  }
  func.func @transform_3(%arg0: i32, %arg1: i32, %arg2: i32) -> (i32, i32) {
    %c0_i32 = arith.constant 0 : i32
    %c0_i32_0 = arith.constant 0 : i32
    return %c0_i32, %arg1 : i32, i32
  }
  func.func @transform_4(%arg0: i32, %arg1: i32, %arg2: i32) -> (i32, i32) {
    %c0_i32 = arith.constant 0 : i32
    %c0_i32_0 = arith.constant 0 : i32
    return %c0_i32, %arg1 : i32, i32
  }
  func.func @transform_5(%arg0: i32, %arg1: i32, %arg2: i32) -> (i32, i32) {
    %c0_i32 = arith.constant 0 : i32
    return %arg0, %arg1 : i32, i32
  }
}

module attributes {stable_mosaic.version = 11 : i64} {
  func.func @_linear_kernel(%arg0: i32, %arg1: i32, %arg2: i32, %arg3: memref<16x128xf32, #tpu.memory_space<vmem>>, %arg4: memref<128x128xf32, #tpu.memory_space<vmem>>, %arg5: memref<1x128xf32, #tpu.memory_space<vmem>>, %arg6: memref<16x128xf32, #tpu.memory_space<vmem>>, %arg7: memref<16x128xf32, #tpu.memory_space<vmem>>) attributes {dimension_semantics = [#tpu.dimension_semantics<parallel>, #tpu.dimension_semantics<parallel>, #tpu.dimension_semantics<arbitrary>], iteration_bounds = array<i64: 1, 1, 1>, scalar_prefetch = 0 : i64, scratch_operands = 1 : i64, tpu.core_type = #tpu.core_type<tc>, window_params = [{transform_indices = @transform_0, window_bounds = array<i64: 16, 128>}, {pipeline_mode = #tpu.pipeline_mode<synchronous>, transform_indices = @transform_1, window_bounds = array<i64: 128, 128>}, {pipeline_mode = #tpu.pipeline_mode<synchronous>, transform_indices = @transform_2, window_bounds = array<i64: 1, 128>}, {transform_indices = @transform_3, window_bounds = array<i64: 16, 128>}]} {
    %c0_i32 = arith.constant 0 : i32
    %0 = arith.cmpi eq, %arg2, %c0_i32 : i32
    %1 = arith.extui %0 : i1 to i32
    %c0_i32_0 = arith.constant 0 : i32
    %2 = arith.cmpi ne, %1, %c0_i32_0 : i32
    scf.if %2 {
      %cst_10 = arith.constant 0.000000e+00 : f32
      %12 = vector.broadcast %cst_10 : f32 to vector<16x128xf32>
      %c0_11 = arith.constant 0 : index
      %c0_12 = arith.constant 0 : index
      %13 = vector.load %arg7[%c0_11, %c0_12] : memref<16x128xf32, #tpu.memory_space<vmem>>, vector<16x128xf32>
      tpu.vector_store %arg7[%c0_11, %c0_12], %12 {strides = array<i32>} : memref<16x128xf32, #tpu.memory_space<vmem>>, vector<16x128xf32>,
    } else {
    }
    %c0 = arith.constant 0 : index
    %c0_1 = arith.constant 0 : index
    %3 = vector.load %arg7[%c0, %c0_1] : memref<16x128xf32, #tpu.memory_space<vmem>>, vector<16x128xf32>
    %c0_2 = arith.constant 0 : index
    %c0_3 = arith.constant 0 : index
    %4 = vector.load %arg3[%c0_2, %c0_3] : memref<16x128xf32, #tpu.memory_space<vmem>>, vector<16x128xf32>
    %c0_4 = arith.constant 0 : index
    %c0_5 = arith.constant 0 : index
    %5 = vector.load %arg4[%c0_4, %c0_5] : memref<128x128xf32, #tpu.memory_space<vmem>>, vector<128x128xf32>
    %cst = arith.constant dense<0.000000e+00> : vector<16x128xf32>
    %6 = tpu.matmul %4, %5, %cst {dimension_numbers = #tpu.dot_dimension_numbers<[1], [0], [0], [1], [0, 0, 1, 1], [], []>} : vector<16x128xf32>, vector<128x128xf32>, vector<16x128xf32> -> vector<16x128xf32>
    %7 = arith.addf %3, %6 : vector<16x128xf32>
    %c0_6 = arith.constant 0 : index
    %c0_7 = arith.constant 0 : index
    %8 = vector.load %arg7[%c0_6, %c0_7] : memref<16x128xf32, #tpu.memory_space<vmem>>, vector<16x128xf32>
    tpu.vector_store %arg7[%c0_6, %c0_7], %7 {strides = array<i32>} : memref<16x128xf32, #tpu.memory_space<vmem>>, vector<16x128xf32>,
    %c0_i32_8 = arith.constant 0 : i32
    %9 = arith.cmpi eq, %arg2, %c0_i32_8 : i32
    %10 = arith.extui %9 : i1 to i32
    %c0_i32_9 = arith.constant 0 : i32
    %11 = arith.cmpi ne, %10, %c0_i32_9 : i32
    scf.if %11 {
      %c0_10 = arith.constant 0 : index
      %c0_11 = arith.constant 0 : index
      %12 = vector.load %arg7[%c0_10, %c0_11] : memref<16x128xf32, #tpu.memory_space<vmem>>, vector<16x128xf32>
      %c0_12 = arith.constant 0 : index
      %c0_13 = arith.constant 0 : index
      %13 = vector.load %arg5[%c0_12, %c0_13] : memref<1x128xf32, #tpu.memory_space<vmem>>, vector<1x128xf32>
      %14 = vector.broadcast %13 : vector<1x128xf32> to vector<16x128xf32>
      %15 = arith.addf %12, %14 : vector<16x128xf32>
      %c0_14 = arith.constant 0 : index
      %c0_15 = arith.constant 0 : index
      %16 = vector.load %arg6[%c0_14, %c0_15] : memref<16x128xf32, #tpu.memory_space<vmem>>, vector<16x128xf32>
      tpu.vector_store %arg6[%c0_14, %c0_15], %15 {strides = array<i32>} : memref<16x128xf32, #tpu.memory_space<vmem>>, vector<16x128xf32>,
    } else {
    }
    return
  }
  func.func @transform_0(%arg0: i32, %arg1: i32, %arg2: i32) -> (i32, i32) {
    %c0_i32 = arith.constant 0 : i32
    return %arg0, %arg2 : i32, i32
  }
  func.func @transform_1(%arg0: i32, %arg1: i32, %arg2: i32) -> (i32, i32) {
    %c0_i32 = arith.constant 0 : i32
    return %arg2, %arg1 : i32, i32
  }
  func.func @transform_2(%arg0: i32, %arg1: i32, %arg2: i32) -> (i32, i32) {
    %c0_i32 = arith.constant 0 : i32
    %c0_i32_0 = arith.constant 0 : i32
    return %c0_i32, %arg1 : i32, i32
  }
  func.func @transform_3(%arg0: i32, %arg1: i32, %arg2: i32) -> (i32, i32) {
    %c0_i32 = arith.constant 0 : i32
    return %arg0, %arg1 : i32, i32
  }
}

</mosaic_0001>

<llo_original>
// kernel: feed_forward.3
$region0: #{feed_forward.3}
  #allocation0 [shape = 'u32[]', space=smem, size = 0x4, offset = 0x4, fixed_abs, tag = 'smem constant byte address 0x4 - core index']
  #allocation1 [shape = 'u32[144,128]{1,0:T(1,128)}', space=vmem, size = 0x12000, scoped, tag = 'internal scratch']
  #allocation2 [shape = 'f32[16,128]{1,0:T(8,128)}', space=vmem, size = 0x2000, scoped, tag = 'scratch operand']
  %s0 = inlined_call_operand.vmem [shape: f32[16,128], index: 0, kind: input, shape index: {}]
  %s1 = inlined_call_operand.vmem [shape: f32[128,128], index: 1, kind: input, shape index: {}]
  %s2 = inlined_call_operand.vmem [shape: f32[1,128], index: 2, kind: input, shape index: {}]
  %s3 = inlined_call_operand.vmem [shape: f32[16,128], index: 3, kind: output, shape index: {}]
  %s4 = sld [smem:[#allocation0]]
  $region30: #{feed_forward.3} parent=0
    _
  %s6 = ssub.s32 1, %s4
  %s7 = scalar_select 0, %s6, %s4
  // Predicated region
  $region2: #{feed_forward.3} parent=0 // pred_check
    _
  $region3: #{feed_forward.3} parent=0 // pred_check_branch
    %9 = sbr.rel (0) target = $region5
  $region4: #{feed_forward.3} parent=0 // pred_region
    _
  $region5: #{feed_forward.3} parent=0 // pred_fallthru
    _
  // Predicated region
  $region6: #{feed_forward.3} parent=0 // pred_check
    _
  $region7: #{feed_forward.3} parent=0 // pred_check_branch
    %11 = sbr.rel (0) target = $region9
  $region8: #{feed_forward.3} parent=0 // pred_region
    _
  $region9: #{feed_forward.3} parent=0 // pred_fallthru
    _
  // Predicated region
  $region10: #{feed_forward.3} parent=0 // pred_check
    _
  $region11: #{feed_forward.3} parent=0 // pred_check_branch
    %13 = sbr.rel (0) target = $region13
  $region12: #{feed_forward.3} parent=0 // pred_region
    _
  $region13: #{feed_forward.3} parent=0 // pred_fallthru
    _
  %p14 = scmp.eq.s32.totalorder 0, 0
  // Predicated region
  $region14: #{feed_forward.3} parent=0 // pred_check
    %p15 = pneg %p14
  $region15: #{feed_forward.3} parent=0 // pred_check_branch
    %17 = sbr.rel (%p15) target = $region17
  $region16: #{feed_forward.3} parent=0 // pred_region
    %18 = vst [vmem:[#allocation2] sm:$0xff] 0.0
    %19 = vst [vmem:[#allocation2 + $0x8] sm:$0xff] 0.0
  $region17: #{feed_forward.3} parent=0 // pred_fallthru
    _
  %v20 = vld [vmem:[#allocation2] sm:$0xff]
  %v21 = vld [vmem:[#allocation2 + $0x8] sm:$0xff]
  %v22 = vld [vmem:[%s0] sm:$0xff]
  %v23 = vld [vmem:[%s0 + $0x8] sm:$0xff]
  %v24 = vld [vmem:[%s1] sm:$0xff]
  %v25 = vld [vmem:[%s1 + $0x8] sm:$0xff]
  %v26 = vld [vmem:[%s1 + $0x10] sm:$0xff]
  %v27 = vld [vmem:[%s1 + $0x18] sm:$0xff]
  %v28 = vld [vmem:[%s1 + $0x20] sm:$0xff]
  %v29 = vld [vmem:[%s1 + $0x28] sm:$0xff]
  %v30 = vld [vmem:[%s1 + $0x30] sm:$0xff]
  %v31 = vld [vmem:[%s1 + $0x38] sm:$0xff]
  %v32 = vld [vmem:[%s1 + $0x40] sm:$0xff]
  %v33 = vld [vmem:[%s1 + $0x48] sm:$0xff]
  %v34 = vld [vmem:[%s1 + $0x50] sm:$0xff]
  %v35 = vld [vmem:[%s1 + $0x58] sm:$0xff]
  %v36 = vld [vmem:[%s1 + $0x60] sm:$0xff]
  %v37 = vld [vmem:[%s1 + $0x68] sm:$0xff]
  %v38 = vld [vmem:[%s1 + $0x70] sm:$0xff]
  %v39 = vld [vmem:[%s1 + $0x78] sm:$0xff]
  %40 = vmatprep.subr.mxu0 0.0
  %41 = vmatpush1.msra.mxu0 %v39
  %42 = vmatprep.subr.mxu0 0.0
  %43 = vmatpush1.msra.mxu0 %v38
  %44 = vmatprep.subr.mxu0 0.0
  %45 = vmatpush1.msra.mxu0 %v37
  %46 = vmatprep.subr.mxu0 0.0
  %47 = vmatpush1.msra.mxu0 %v36
  %48 = vmatprep.subr.mxu0 0.0
  %49 = vmatpush1.msra.mxu0 %v35
  %50 = vmatprep.subr.mxu0 0.0
  %51 = vmatpush1.msra.mxu0 %v34
  %52 = vmatprep.subr.mxu0 0.0
  %53 = vmatpush1.msra.mxu0 %v33
  %54 = vmatprep.subr.mxu0 0.0
  %55 = vmatpush1.msra.mxu0 %v32
  %56 = vmatprep.subr.mxu0 0.0
  %57 = vmatpush1.msra.mxu0 %v31
  %58 = vmatprep.subr.mxu0 0.0
  %59 = vmatpush1.msra.mxu0 %v30
  %60 = vmatprep.subr.mxu0 0.0
  %61 = vmatpush1.msra.mxu0 %v29
  %62 = vmatprep.subr.mxu0 0.0
  %63 = vmatpush1.msra.mxu0 %v28
  %64 = vmatprep.subr.mxu0 0.0
  %65 = vmatpush1.msra.mxu0 %v27
  %66 = vmatprep.subr.mxu0 0.0
  %67 = vmatpush1.msra.mxu0 %v26
  %68 = vmatprep.subr.mxu0 0.0
  %69 = vmatpush1.msra.mxu0 %v25
  %70 = vmatprep.subr.mxu0 0.0
  %71 = vmatpush1.msra.mxu0 %v24
  %72 = vmatprep.subr.mxu0 0.0
  %73 = vmatpush2.msra.mxu0 0.0
  %74 = vmatprep.subr.mxu0 0.0
  %75 = vmatpush2.msra.mxu0 0.0
  %76 = vmatprep.subr.mxu0 0.0
  %77 = vmatpush2.msra.mxu0 0.0
  %78 = vmatprep.subr.mxu0 0.0
  %79 = vmatpush2.msra.mxu0 0.0
  %80 = vmatprep.subr.mxu0 0.0
  %81 = vmatpush2.msra.mxu0 0.0
  %82 = vmatprep.subr.mxu0 0.0
  %83 = vmatpush2.msra.mxu0 0.0
  %84 = vmatprep.subr.mxu0 0.0
  %85 = vmatpush2.msra.mxu0 0.0
  %86 = vmatprep.subr.mxu0 0.0
  %87 = vmatpush2.msra.mxu0 0.0
  %88 = vmatprep.subr.mxu0 0.0
  %89 = vmatpush2.msra.mxu0 0.0
  %90 = vmatprep.subr.mxu0 0.0
  %91 = vmatpush2.msra.mxu0 0.0
  %92 = vmatprep.subr.mxu0 0.0
  %93 = vmatpush2.msra.mxu0 0.0
  %94 = vmatprep.subr.mxu0 0.0
  %95 = vmatpush2.msra.mxu0 0.0
  %96 = vmatprep.subr.mxu0 0.0
  %97 = vmatpush2.msra.mxu0 0.0
  %98 = vmatprep.subr.mxu0 0.0
  %99 = vmatpush2.msra.mxu0 0.0
  %100 = vmatprep.subr.mxu0 0.0
  %101 = vmatpush2.msra.mxu0 0.0
  %102 = vmatprep.subr.mxu0 0.0
  %103 = vmatpush2.msra.mxu0 0.0
  %104 = vmatprep.mubr.f32.mxu0 0.0
  %105 = vmatmul.mubr.f32.gmra.mxu0 %v22
  %v106 = vpop.f32.mrf.mxu0
  %v107 = vadd.f32 0.0, %v106
  %v108 = vpop.f32.mrf.mxu0
  %109 = vmatprep.mubr.f32.mxu0 0.0
  %110 = vmatmul.mubr.f32.gmra.mxu0 %v23
  %v111 = vpop.f32.mrf.mxu0
  %v112 = vadd.f32 0.0, %v111
  %v113 = vpop.f32.mrf.mxu0
  %114 = vdwg.mxu0
  %v115 = vadd.f32 %v20, %v107
  %v116 = vadd.f32 %v21, %v112
  %117 = vst [vmem:[#allocation2] sm:$0xff] %v115
  %118 = vst [vmem:[#allocation2 + $0x8] sm:$0xff] %v116
  // Predicated region
  $region18: #{feed_forward.3} parent=0 // pred_check
    %p119 = pneg %p14
  $region19: #{feed_forward.3} parent=0 // pred_check_branch
    %121 = sbr.rel (%p119) target = $region21
  $region20: #{feed_forward.3} parent=0 // pred_region
    %v122 = vld [vmem:[#allocation2] sm:$0xff]
    %v123 = vld [vmem:[#allocation2 + $0x8] sm:$0xff]
    %v124 = vld [vmem:[%s2] sm:$0x1]
    %v126 = vlaneseq
    %v127 = vshrl.u32 %v126, 7
    %v128 = vsub.s32 0, %v127
    %v129 = vrot.slane %v124, %v128
    %v131 = vadd.f32 %v122, %v129
    %v132 = vadd.f32 %v123, %v129
    %133 = vst [vmem:[%s3] sm:$0xff] %v131
    %134 = vst [vmem:[%s3 + $0x8] sm:$0xff] %v132
  $region21: #{feed_forward.3} parent=0 // pred_fallthru
    _
  // Predicated region
  $region22: #{feed_forward.3} parent=0 // pred_check
    _
  $region23: #{feed_forward.3} parent=0 // pred_check_branch
    %136 = sbr.rel (0) target = $region25
  $region24: #{feed_forward.3} parent=0 // pred_region
    _
  $region25: #{feed_forward.3} parent=0 // pred_fallthru
    _
  // Predicated region
  $region26: #{feed_forward.3} parent=0 // pred_check
    _
  $region27: #{feed_forward.3} parent=0 // pred_check_branch
    %138 = sbr.rel (0) target = $region29
  $region28: #{feed_forward.3} parent=0 // pred_region
    _
  $region29: #{feed_forward.3} parent=0 // pred_fallthru
    _

// kernel: feed_forward.2
$region0: #{feed_forward.2}
  #allocation0 [shape = 'u32[]', space=smem, size = 0x4, offset = 0x4, fixed_abs, tag = 'smem constant byte address 0x4 - core index']
  #allocation1 [shape = 'u32[144,128]{1,0:T(1,128)}', space=vmem, size = 0x12000, scoped, tag = 'internal scratch']
  #allocation2 [shape = 'f32[16,128]{1,0:T(8,128)}', space=vmem, size = 0x2000, scoped, tag = 'scratch operand']
  #allocation3 [shape = 'f32[16,128]{1,0:T(8,128)}', space=vmem, size = 0x2000, scoped, tag = 'scratch operand']
  %s0 = inlined_call_operand.vmem [shape: f32[16,32], index: 0, kind: input, shape index: {}]
  %s1 = inlined_call_operand.vmem [shape: f32[32,128], index: 1, kind: input, shape index: {}]
  %s2 = inlined_call_operand.vmem [shape: f32[32,128], index: 2, kind: input, shape index: {}]
  %s3 = inlined_call_operand.vmem [shape: f32[1,128], index: 3, kind: input, shape index: {}]
  %s4 = inlined_call_operand.vmem [shape: f32[1,128], index: 4, kind: input, shape index: {}]
  %s5 = inlined_call_operand.vmem [shape: f32[16,128], index: 5, kind: output, shape index: {}]
  %s6 = sld [smem:[#allocation0]]
  $region38: #{feed_forward.2} parent=0
    _
  %s8 = ssub.s32 1, %s6
  %s9 = scalar_select 0, %s8, %s6
  // Predicated region
  $region2: #{feed_forward.2} parent=0 // pred_check
    _
  $region3: #{feed_forward.2} parent=0 // pred_check_branch
    %11 = sbr.rel (0) target = $region5
  $region4: #{feed_forward.2} parent=0 // pred_region
    _
  $region5: #{feed_forward.2} parent=0 // pred_fallthru
    _
  // Predicated region
  $region6: #{feed_forward.2} parent=0 // pred_check
    _
  $region7: #{feed_forward.2} parent=0 // pred_check_branch
    %13 = sbr.rel (0) target = $region9
  $region8: #{feed_forward.2} parent=0 // pred_region
    _
  $region9: #{feed_forward.2} parent=0 // pred_fallthru
    _
  // Predicated region
  $region10: #{feed_forward.2} parent=0 // pred_check
    _
  $region11: #{feed_forward.2} parent=0 // pred_check_branch
    %15 = sbr.rel (0) target = $region13
  $region12: #{feed_forward.2} parent=0 // pred_region
    _
  $region13: #{feed_forward.2} parent=0 // pred_fallthru
    _
  // Predicated region
  $region14: #{feed_forward.2} parent=0 // pred_check
    _
  $region15: #{feed_forward.2} parent=0 // pred_check_branch
    %17 = sbr.rel (0) target = $region17
  $region16: #{feed_forward.2} parent=0 // pred_region
    _
  $region17: #{feed_forward.2} parent=0 // pred_fallthru
    _
  // Predicated region
  $region18: #{feed_forward.2} parent=0 // pred_check
    _
  $region19: #{feed_forward.2} parent=0 // pred_check_branch
    %19 = sbr.rel (0) target = $region21
  $region20: #{feed_forward.2} parent=0 // pred_region
    _
  $region21: #{feed_forward.2} parent=0 // pred_fallthru
    _
  %p20 = scmp.eq.s32.totalorder 0, 0
  // Predicated region
  $region22: #{feed_forward.2} parent=0 // pred_check
    %p21 = pneg %p20
  $region23: #{feed_forward.2} parent=0 // pred_check_branch
    %23 = sbr.rel (%p21) target = $region25
  $region24: #{feed_forward.2} parent=0 // pred_region
    %24 = vst [vmem:[#allocation2] sm:$0xff] 0.0
    %25 = vst [vmem:[#allocation2 + $0x8] sm:$0xff] 0.0
    %26 = vst [vmem:[#allocation3] sm:$0xff] 0.0
    %27 = vst [vmem:[#allocation3 + $0x8] sm:$0xff] 0.0
  $region25: #{feed_forward.2} parent=0 // pred_fallthru
    _
  %v28 = vld [vmem:[%s0] sm:$0xff]
  %v29 = vld [vmem:[%s0 + $0x8] sm:$0xff]
  %v30 = vld [vmem:[#allocation2] sm:$0xff]
  %v31 = vld [vmem:[#allocation2 + $0x8] sm:$0xff]
  %v32 = vld [vmem:[%s1] sm:$0xff]
  %v33 = vld [vmem:[%s1 + $0x8] sm:$0xff]
  %v34 = vld [vmem:[%s1 + $0x10] sm:$0xff]
  %v35 = vld [vmem:[%s1 + $0x18] sm:$0xff]
  %vm36 = vcmask 261120
  %v38 = vsel %vm36, %v28, 0
  %v41 = vsel %vm36, %v29, 0
  %43 = vmatprep.subr.mxu0 0.0
  %44 = vmatpush1.msra.mxu0 0.0
  %45 = vmatprep.subr.mxu0 0.0
  %46 = vmatpush1.msra.mxu0 0.0
  %47 = vmatprep.subr.mxu0 0.0
  %48 = vmatpush1.msra.mxu0 0.0
  %49 = vmatprep.subr.mxu0 0.0
  %50 = vmatpush1.msra.mxu0 0.0
  %51 = vmatprep.subr.mxu0 0.0
  %52 = vmatpush1.msra.mxu0 0.0
  %53 = vmatprep.subr.mxu0 0.0
  %54 = vmatpush1.msra.mxu0 0.0
  %55 = vmatprep.subr.mxu0 0.0
  %56 = vmatpush1.msra.mxu0 0.0
  %57 = vmatprep.subr.mxu0 0.0
  %58 = vmatpush1.msra.mxu0 0.0
  %59 = vmatprep.subr.mxu0 0.0
  %60 = vmatpush1.msra.mxu0 0.0
  %61 = vmatprep.subr.mxu0 0.0
  %62 = vmatpush1.msra.mxu0 0.0
  %63 = vmatprep.subr.mxu0 0.0
  %64 = vmatpush1.msra.mxu0 0.0
  %65 = vmatprep.subr.mxu0 0.0
  %66 = vmatpush1.msra.mxu0 0.0
  %67 = vmatprep.subr.mxu0 0.0
  %68 = vmatpush1.msra.mxu0 %v35
  %69 = vmatprep.subr.mxu0 0.0
  %70 = vmatpush1.msra.mxu0 %v34
  %71 = vmatprep.subr.mxu0 0.0
  %72 = vmatpush1.msra.mxu0 %v33
  %73 = vmatprep.subr.mxu0 0.0
  %74 = vmatpush1.msra.mxu0 %v32
  %75 = vmatprep.subr.mxu0 0.0
  %76 = vmatpush2.msra.mxu0 0.0
  %77 = vmatprep.subr.mxu0 0.0
  %78 = vmatpush2.msra.mxu0 0.0
  %79 = vmatprep.subr.mxu0 0.0
  %80 = vmatpush2.msra.mxu0 0.0
  %81 = vmatprep.subr.mxu0 0.0
  %82 = vmatpush2.msra.mxu0 0.0
  %83 = vmatprep.subr.mxu0 0.0
  %84 = vmatpush2.msra.mxu0 0.0
  %85 = vmatprep.subr.mxu0 0.0
  %86 = vmatpush2.msra.mxu0 0.0
  %87 = vmatprep.subr.mxu0 0.0
  %88 = vmatpush2.msra.mxu0 0.0
  %89 = vmatprep.subr.mxu0 0.0
  %90 = vmatpush2.msra.mxu0 0.0
  %91 = vmatprep.subr.mxu0 0.0
  %92 = vmatpush2.msra.mxu0 0.0
  %93 = vmatprep.subr.mxu0 0.0
  %94 = vmatpush2.msra.mxu0 0.0
  %95 = vmatprep.subr.mxu0 0.0
  %96 = vmatpush2.msra.mxu0 0.0
  %97 = vmatprep.subr.mxu0 0.0
  %98 = vmatpush2.msra.mxu0 0.0
  %99 = vmatprep.subr.mxu0 0.0
  %100 = vmatpush2.msra.mxu0 0.0
  %101 = vmatprep.subr.mxu0 0.0
  %102 = vmatpush2.msra.mxu0 0.0
  %103 = vmatprep.subr.mxu0 0.0
  %104 = vmatpush2.msra.mxu0 0.0
  %105 = vmatprep.subr.mxu0 0.0
  %106 = vmatpush2.msra.mxu0 0.0
  %107 = vmatprep.mubr.f32.mxu0 0.0
  %108 = vmatmul.mubr.f32.gmra.mxu0 %v38
  %v109 = vpop.f32.mrf.mxu0
  %v110 = vadd.f32 0.0, %v109
  %v111 = vpop.f32.mrf.mxu0
  %112 = vmatprep.mubr.f32.mxu0 0.0
  %113 = vmatmul.mubr.f32.gmra.mxu0 %v41
  %v114 = vpop.f32.mrf.mxu0
  %v115 = vadd.f32 0.0, %v114
  %v116 = vpop.f32.mrf.mxu0
  %117 = vdwg.mxu0
  %v118 = vadd.f32 %v30, %v110
  %v119 = vadd.f32 %v31, %v115
  %120 = vst [vmem:[#allocation2] sm:$0xff] %v118
  %121 = vst [vmem:[#allocation2 + $0x8] sm:$0xff] %v119
  %v122 = vld [vmem:[#allocation3] sm:$0xff]
  %v123 = vld [vmem:[#allocation3 + $0x8] sm:$0xff]
  %v124 = vld [vmem:[%s2] sm:$0xff]
  %v125 = vld [vmem:[%s2 + $0x8] sm:$0xff]
  %v126 = vld [vmem:[%s2 + $0x10] sm:$0xff]
  %v127 = vld [vmem:[%s2 + $0x18] sm:$0xff]
  %128 = vmatprep.subr.mxu0 0.0
  %129 = vmatpush1.msra.mxu0 0.0
  %130 = vmatprep.subr.mxu0 0.0
  %131 = vmatpush1.msra.mxu0 0.0
  %132 = vmatprep.subr.mxu0 0.0
  %133 = vmatpush1.msra.mxu0 0.0
  %134 = vmatprep.subr.mxu0 0.0
  %135 = vmatpush1.msra.mxu0 0.0
  %136 = vmatprep.subr.mxu0 0.0
  %137 = vmatpush1.msra.mxu0 0.0
  %138 = vmatprep.subr.mxu0 0.0
  %139 = vmatpush1.msra.mxu0 0.0
  %140 = vmatprep.subr.mxu0 0.0
  %141 = vmatpush1.msra.mxu0 0.0
  %142 = vmatprep.subr.mxu0 0.0
  %143 = vmatpush1.msra.mxu0 0.0
  %144 = vmatprep.subr.mxu0 0.0
  %145 = vmatpush1.msra.mxu0 0.0
  %146 = vmatprep.subr.mxu0 0.0
  %147 = vmatpush1.msra.mxu0 0.0
  %148 = vmatprep.subr.mxu0 0.0
  %149 = vmatpush1.msra.mxu0 0.0
  %150 = vmatprep.subr.mxu0 0.0
  %151 = vmatpush1.msra.mxu0 0.0
  %152 = vmatprep.subr.mxu0 0.0
  %153 = vmatpush1.msra.mxu0 %v127
  %154 = vmatprep.subr.mxu0 0.0
  %155 = vmatpush1.msra.mxu0 %v126
  %156 = vmatprep.subr.mxu0 0.0
  %157 = vmatpush1.msra.mxu0 %v125
  %158 = vmatprep.subr.mxu0 0.0
  %159 = vmatpush1.msra.mxu0 %v124
  %160 = vmatprep.subr.mxu0 0.0
  %161 = vmatpush2.msra.mxu0 0.0
  %162 = vmatprep.subr.mxu0 0.0
  %163 = vmatpush2.msra.mxu0 0.0
  %164 = vmatprep.subr.mxu0 0.0
  %165 = vmatpush2.msra.mxu0 0.0
  %166 = vmatprep.subr.mxu0 0.0
  %167 = vmatpush2.msra.mxu0 0.0
  %168 = vmatprep.subr.mxu0 0.0
  %169 = vmatpush2.msra.mxu0 0.0
  %170 = vmatprep.subr.mxu0 0.0
  %171 = vmatpush2.msra.mxu0 0.0
  %172 = vmatprep.subr.mxu0 0.0
  %173 = vmatpush2.msra.mxu0 0.0
  %174 = vmatprep.subr.mxu0 0.0
  %175 = vmatpush2.msra.mxu0 0.0
  %176 = vmatprep.subr.mxu0 0.0
  %177 = vmatpush2.msra.mxu0 0.0
  %178 = vmatprep.subr.mxu0 0.0
  %179 = vmatpush2.msra.mxu0 0.0
  %180 = vmatprep.subr.mxu0 0.0
  %181 = vmatpush2.msra.mxu0 0.0
  %182 = vmatprep.subr.mxu0 0.0
  %183 = vmatpush2.msra.mxu0 0.0
  %184 = vmatprep.subr.mxu0 0.0
  %185 = vmatpush2.msra.mxu0 0.0
  %186 = vmatprep.subr.mxu0 0.0
  %187 = vmatpush2.msra.mxu0 0.0
  %188 = vmatprep.subr.mxu0 0.0
  %189 = vmatpush2.msra.mxu0 0.0
  %190 = vmatprep.subr.mxu0 0.0
  %191 = vmatpush2.msra.mxu0 0.0
  %192 = vmatprep.mubr.f32.mxu0 0.0
  %193 = vmatmul.mubr.f32.gmra.mxu0 %v38
  %v194 = vpop.f32.mrf.mxu0
  %v195 = vadd.f32 0.0, %v194
  %v196 = vpop.f32.mrf.mxu0
  %197 = vmatprep.mubr.f32.mxu0 0.0
  %198 = vmatmul.mubr.f32.gmra.mxu0 %v41
  %v199 = vpop.f32.mrf.mxu0
  %v200 = vadd.f32 0.0, %v199
  %v201 = vpop.f32.mrf.mxu0
  %202 = vdwg.mxu0
  %v203 = vadd.f32 %v122, %v195
  %v204 = vadd.f32 %v123, %v200
  %205 = vst [vmem:[#allocation3] sm:$0xff] %v203
  %206 = vst [vmem:[#allocation3 + $0x8] sm:$0xff] %v204
  // Predicated region
  $region26: #{feed_forward.2} parent=0 // pred_check
    %p207 = pneg %p20
  $region27: #{feed_forward.2} parent=0 // pred_check_branch
    %209 = sbr.rel (%p207) target = $region29
  $region28: #{feed_forward.2} parent=0 // pred_region
    %v210 = vld [vmem:[#allocation2] sm:$0xff]
    %v211 = vld [vmem:[#allocation2 + $0x8] sm:$0xff]
    %v212 = vld [vmem:[%s3] sm:$0x1]
    %v214 = vlaneseq
    %v215 = vshrl.u32 %v214, 7
    %v216 = vsub.s32 0, %v215
    %v217 = vrot.slane %v212, %v216
    %v219 = vadd.f32 %v210, %v217
    %v220 = vadd.f32 %v211, %v217
    %v221 = vld [vmem:[#allocation3] sm:$0xff]
    %v222 = vld [vmem:[#allocation3 + $0x8] sm:$0xff]
    %v223 = vld [vmem:[%s4] sm:$0x1]
    %v225 = vlaneseq
    %v226 = vshrl.u32 %v225, 7
    %v227 = vsub.s32 0, %v226
    %v228 = vrot.slane %v223, %v227
    %v230 = vadd.f32 %v221, %v228
    %v231 = vadd.f32 %v222, %v228
    %v232 = vmul.f32 %v230, 0.5
    %v233 = vmul.f32 %v231, 0.5
    %v234 = vmul.f32 %v230, 0.70710677
    %v235 = vmul.f32 %v231, 0.70710677
    %v236 = verf.f32.pop %v234
    %v237 = verf.f32.pop %v235
    %v238 = vadd.f32 %v236, 1.0
    %v239 = vadd.f32 %v237, 1.0
    %v240 = vmul.f32 %v232, %v238
    %v241 = vmul.f32 %v233, %v239
    %v242 = vmul.f32 %v219, %v240
    %v243 = vmul.f32 %v220, %v241
    %244 = vst [vmem:[%s5] sm:$0xff] %v242
    %245 = vst [vmem:[%s5 + $0x8] sm:$0xff] %v243
  $region29: #{feed_forward.2} parent=0 // pred_fallthru
    _
  // Predicated region
  $region30: #{feed_forward.2} parent=0 // pred_check
    _
  $region31: #{feed_forward.2} parent=0 // pred_check_branch
    %247 = sbr.rel (0) target = $region33
  $region32: #{feed_forward.2} parent=0 // pred_region
    _
  $region33: #{feed_forward.2} parent=0 // pred_fallthru
    _
  // Predicated region
  $region34: #{feed_forward.2} parent=0 // pred_check
    _
  $region35: #{feed_forward.2} parent=0 // pred_check_branch
    %249 = sbr.rel (0) target = $region37
  $region36: #{feed_forward.2} parent=0 // pred_region
    _
  $region37: #{feed_forward.2} parent=0 // pred_fallthru
    _

</llo_original>
